<compile_context>
chip_gen: v5e
topology: v5e:2x2
jax: 0.10.0
libtpu: 0.0.40
codegen_flags: <defaults>
</compile_context>

<pallas_src>
import functools

import jax
import jax.numpy as jnp
from jax.experimental import pallas as pl
from jax.experimental.pallas import tpu as pltpu

INPUT_SIZE = 63
HIDDEN1 = 128
HIDDEN2 = 64
# TODO(synk): roboflow_label_classes.npy is not available; fixed synthetic class count.
NUM_CLASSES = 5

K_PAD = 128      # padded input-feature (contraction) dim
C_PAD = 128      # padded class (output lane) dim
MAX_TILE = 2048  # rows per grid step cap (x bf16 + out bf16 double-buffered << VMEM)


def _round_up(n, m):
    return (n + m - 1) // m * m


def _num_tensorcores():
    """2 on v7x (megacore pair), 1 on v5e/v6e.  Best-effort, safe default 1."""
    try:
        kind = getattr(jax.devices()[0], "device_kind", "") or ""
        if "v7" in kind.lower():
            return 2
    except Exception:
        pass
    return 1


_NUM_CORES = _num_tensorcores()


def _pick_tiling(B):
    """Return (B_pad, batch_tile) minimizing padding and grid steps."""
    # v7x: exactly one tile per TensorCore when it fits.
    if _NUM_CORES > 1:
        b_pad = _round_up(B, 128 * _NUM_CORES)
        tile = b_pad // _NUM_CORES
        if tile <= MAX_TILE:
            return b_pad, tile
    # Single core (or very large B): pad to the next 128 multiple and pick the
    # largest 128-multiple tile that divides B_pad (<= MAX_TILE).
    b_pad = _round_up(B, 128)
    n_blocks = b_pad // 128
    max_blocks = MAX_TILE // 128
    tile_blocks = 1
    for cand in range(min(n_blocks, max_blocks), 0, -1):
        if n_blocks % cand == 0:
            tile_blocks = cand
            break
    return b_pad, tile_blocks * 128


def _mlp_kernel(x_ref, w1_ref, b1_ref, w2_ref, b2_ref, w3_ref, b3_ref, o_ref):
    # fc1: bf16 x bf16 on the MXU, f32 accumulate; bias + ReLU in f32 on the VPU.
    h1 = jnp.dot(x_ref[...], w1_ref[...], preferred_element_type=jnp.float32)
    h1 = jnp.maximum(h1 + b1_ref[...], 0.0)
    # Dropout(p=0.2) is identity in eval/inference mode.
    # TODO(synk): training-mode dropout (random mask + 1/(1-p) scaling) not implemented.
    # fc2
    h2 = jnp.dot(h1.astype(jnp.bfloat16), w2_ref[...],
                 preferred_element_type=jnp.float32)
    h2 = jnp.maximum(h2 + b2_ref[...], 0.0)
    # fc3 (logits, lane-padded to C_PAD with zero columns -> dense 128-wide stores)
    logits = jnp.dot(h2.astype(jnp.bfloat16), w3_ref[...],
                     preferred_element_type=jnp.float32)
    o_ref[...] = (logits + b3_ref[...]).astype(o_ref.dtype)  # bf16 store


def prepare_params(params):
    """One-time pad + bf16 cast of weights/biases (hoisted out of the forward path)."""
    w1, b1, w2, b2, w3, b3 = params
    w1_p = jnp.zeros((K_PAD, HIDDEN1), jnp.bfloat16)
    w1_p = w1_p.at[:INPUT_SIZE].set(w1.astype(jnp.bfloat16))
    w2_p = w2.astype(jnp.bfloat16)
    w3_p = jnp.zeros((HIDDEN2, C_PAD), jnp.bfloat16)
    w3_p = w3_p.at[:, :NUM_CLASSES].set(w3.astype(jnp.bfloat16))

    b1_p = jnp.reshape(b1.astype(jnp.float32), (1, HIDDEN1))
    b2_p = jnp.reshape(b2.astype(jnp.float32), (1, HIDDEN2))
    b3_p = jnp.zeros((1, C_PAD), jnp.float32)
    b3_p = b3_p.at[:, :NUM_CLASSES].set(jnp.reshape(b3.astype(jnp.float32), (1, -1)))

    return tuple(jax.device_put(a) for a in (w1_p, b1_p, w2_p, b2_p, w3_p, b3_p))


@jax.jit
def gesture_classifier_forward(x, prepared_params):
    """x: (B, INPUT_SIZE) float32. Returns logits (B, NUM_CLASSES) float32."""
    w1_p, b1_p, w2_p, b2_p, w3_p, b3_p = prepared_params
    B = x.shape[0]
    B_pad, batch_tile = _pick_tiling(B)
    grid_steps = B_pad // batch_tile

    # Single fused pad+cast; allow_input_fusion lets XLA fold this into the
    # pallas_call's input DMA (no padded bf16 x materialized in HBM).
    x_p = jnp.pad(x.astype(jnp.bfloat16),
                  ((0, B_pad - B), (0, K_PAD - INPUT_SIZE)))

    # Constant index maps -> Pallas keeps these blocks VMEM-resident across the grid.
    const = lambda *shape: pl.BlockSpec(shape, lambda i: tuple(0 for _ in shape))

    flops = 2 * B_pad * (K_PAD * HIDDEN1 + HIDDEN1 * HIDDEN2 + HIDDEN2 * C_PAD)
    bytes_accessed = (
        B_pad * K_PAD * 2 + B_pad * C_PAD * 2                      # x in, logits out (bf16)
        + (K_PAD * HIDDEN1 + HIDDEN1 * HIDDEN2 + HIDDEN2 * C_PAD) * 2  # bf16 weights
        + (HIDDEN1 + HIDDEN2 + C_PAD) * 4)                         # f32 biases

    logits_p = pl.pallas_call(
        _mlp_kernel,
        out_shape=jax.ShapeDtypeStruct((B_pad, C_PAD), jnp.bfloat16),
        grid=(grid_steps,),
        in_specs=[
            pl.BlockSpec((batch_tile, K_PAD), lambda i: (i, 0)),  # x tile
            const(K_PAD, HIDDEN1),      # w1
            const(1, HIDDEN1),          # b1
            const(HIDDEN1, HIDDEN2),    # w2
            const(1, HIDDEN2),          # b2
            const(HIDDEN2, C_PAD),      # w3 (class-padded)
            const(1, C_PAD),            # b3 (class-padded)
        ],
        out_specs=pl.BlockSpec((batch_tile, C_PAD), lambda i: (i, 0)),
        compiler_params=pltpu.CompilerParams(
            dimension_semantics=("parallel",),
            allow_input_fusion=[True, False, False, False, False, False, False]),
        cost_estimate=pl.CostEstimate(
            flops=flops, transcendentals=0, bytes_accessed=bytes_accessed),
    )(x_p, w1_p, b1_p, w2_p, b2_p, w3_p, b3_p)

    # Tiny (B, 5) slice + cast back to f32 for the caller.
    return logits_p[:B, :NUM_CLASSES].astype(jnp.float32)


def init_params(key):
    """Deterministic init mimicking nn.Linear's uniform(-1/sqrt(fan_in), +1/sqrt(fan_in))."""
    def linear(key, fan_in, fan_out):
        kw, kb = jax.random.split(key)
        bound = 1.0 / jnp.sqrt(float(fan_in))
        w = jax.random.uniform(kw, (fan_in, fan_out), jnp.float32, -bound, bound)
        b = jax.random.uniform(kb, (1, fan_out), jnp.float32, -bound, bound)
        return w, b

    k1, k2, k3 = jax.random.split(key, 3)
    w1, b1 = linear(k1, INPUT_SIZE, HIDDEN1)
    w2, b2 = linear(k2, HIDDEN1, HIDDEN2)
    w3, b3 = linear(k3, HIDDEN2, NUM_CLASSES)
    return (w1, b1, w2, b2, w3, b3)


def reference_forward(x, params):
    """Plain-JAX reference using the same bf16 operand rounding as the kernel."""
    w1, b1, w2, b2, w3, b3 = params
    r = lambda a: a.astype(jnp.bfloat16).astype(jnp.float32)
    h1 = jnp.maximum(r(x) @ r(w1) + b1, 0.0)
    h2 = jnp.maximum(r(h1) @ r(w2) + b2, 0.0)
    return r(h2) @ r(w3) + b3


if __name__ == "__main__":
    key = jax.random.PRNGKey(0)
    kx1, kx2, kp = jax.random.split(key, 3)
    params = init_params(kp)
    prepared = prepare_params(params)   # pad/cast weights once, reused every call

    # Small ragged batch (exercises batch padding) and a multi-128-block batch.
    for kx, B in ((kx1, 8), (kx2, 300)):
        x = jax.random.normal(kx, (B, INPUT_SIZE), jnp.float32)
        logits = jax.block_until_ready(gesture_classifier_forward(x, prepared))
        ref = reference_forward(x, params)
        assert logits.shape == (B, NUM_CLASSES)
        # Kernel stores bf16 logits -> tolerance reflects one extra bf16 rounding.
        err = float(jnp.max(jnp.abs(logits - ref)))
        assert jnp.allclose(logits, ref, atol=1e-2, rtol=1e-2), f"max abs err {err}"

    print("KERNEL_OK")
</pallas_src>

<mosaic_0001>
module attributes {stable_mosaic.version = 11 : i64} {
  func.func @_mlp_kernel(%arg0: i32, %arg1: memref<128x128xbf16, #tpu.memory_space<vmem>>, %arg2: memref<128x128xbf16, #tpu.memory_space<vmem>>, %arg3: memref<1x128xf32, #tpu.memory_space<vmem>>, %arg4: memref<128x64xbf16, #tpu.memory_space<vmem>>, %arg5: memref<1x64xf32, #tpu.memory_space<vmem>>, %arg6: memref<64x128xbf16, #tpu.memory_space<vmem>>, %arg7: memref<1x128xf32, #tpu.memory_space<vmem>>, %arg8: memref<128x128xbf16, #tpu.memory_space<vmem>>) attributes {dimension_semantics = [#tpu.dimension_semantics<parallel>], iteration_bounds = array<i64: 1>, scalar_prefetch = 0 : i64, scratch_operands = 0 : i64, tpu.core_type = #tpu.core_type<tc>, window_params = [{transform_indices = @transform_0, window_bounds = array<i64: 128, 128>}, {pipeline_mode = #tpu.pipeline_mode<synchronous>, transform_indices = @transform_1, window_bounds = array<i64: 128, 128>}, {pipeline_mode = #tpu.pipeline_mode<synchronous>, transform_indices = @transform_2, window_bounds = array<i64: 1, 128>}, {pipeline_mode = #tpu.pipeline_mode<synchronous>, transform_indices = @transform_3, window_bounds = array<i64: 128, 64>}, {pipeline_mode = #tpu.pipeline_mode<synchronous>, transform_indices = @transform_4, window_bounds = array<i64: 1, 64>}, {pipeline_mode = #tpu.pipeline_mode<synchronous>, transform_indices = @transform_5, window_bounds = array<i64: 64, 128>}, {pipeline_mode = #tpu.pipeline_mode<synchronous>, transform_indices = @transform_6, window_bounds = array<i64: 1, 128>}, {transform_indices = @transform_7, window_bounds = array<i64: 128, 128>}]} {
    %c0 = arith.constant 0 : index
    %c0_0 = arith.constant 0 : index
    %0 = vector.load %arg1[%c0, %c0_0] : memref<128x128xbf16, #tpu.memory_space<vmem>>, vector<128x128xbf16>
    %c0_1 = arith.constant 0 : index
    %c0_2 = arith.constant 0 : index
    %1 = vector.load %arg2[%c0_1, %c0_2] : memref<128x128xbf16, #tpu.memory_space<vmem>>, vector<128x128xbf16>
    %cst = arith.constant dense<0.000000e+00> : vector<128x128xf32>
    %2 = tpu.matmul %0, %1, %cst {dimension_numbers = #tpu.dot_dimension_numbers<[1], [0], [0], [1], [0, 0, 1, 1], [], []>} : vector<128x128xbf16>, vector<128x128xbf16>, vector<128x128xf32> -> vector<128x128xf32>
    %c0_3 = arith.constant 0 : index
    %c0_4 = arith.constant 0 : index
    %3 = vector.load %arg3[%c0_3, %c0_4] : memref<1x128xf32, #tpu.memory_space<vmem>>, vector<1x128xf32>
    %4 = vector.broadcast %3 : vector<1x128xf32> to vector<128x128xf32>
    %5 = arith.addf %2, %4 : vector<128x128xf32>
    %cst_5 = arith.constant 0.000000e+00 : f32
    %6 = vector.broadcast %cst_5 : f32 to vector<128x128xf32>
    %7 = arith.maximumf %5, %6 : vector<128x128xf32>
    %8 = arith.truncf %7 : vector<128x128xf32> to vector<128x128xbf16>
    %c0_6 = arith.constant 0 : index
    %c0_7 = arith.constant 0 : index
    %9 = vector.load %arg4[%c0_6, %c0_7] : memref<128x64xbf16, #tpu.memory_space<vmem>>, vector<128x64xbf16>
    %cst_8 = arith.constant dense<0.000000e+00> : vector<128x64xf32>
    %10 = tpu.matmul %8, %9, %cst_8 {dimension_numbers = #tpu.dot_dimension_numbers<[1], [0], [0], [1], [0, 0, 1, 1], [], []>} : vector<128x128xbf16>, vector<128x64xbf16>, vector<128x64xf32> -> vector<128x64xf32>
    %c0_9 = arith.constant 0 : index
    %c0_10 = arith.constant 0 : index
    %11 = vector.load %arg5[%c0_9, %c0_10] : memref<1x64xf32, #tpu.memory_space<vmem>>, vector<1x64xf32>
    %12 = vector.broadcast %11 : vector<1x64xf32> to vector<128x64xf32>
    %13 = arith.addf %10, %12 : vector<128x64xf32>
    %cst_11 = arith.constant 0.000000e+00 : f32
    %14 = vector.broadcast %cst_11 : f32 to vector<128x64xf32>
    %15 = arith.maximumf %13, %14 : vector<128x64xf32>
    %16 = arith.truncf %15 : vector<128x64xf32> to vector<128x64xbf16>
    %c0_12 = arith.constant 0 : index
    %c0_13 = arith.constant 0 : index
    %17 = vector.load %arg6[%c0_12, %c0_13] : memref<64x128xbf16, #tpu.memory_space<vmem>>, vector<64x128xbf16>
    %cst_14 = arith.constant dense<0.000000e+00> : vector<128x128xf32>
    %18 = tpu.matmul %16, %17, %cst_14 {dimension_numbers = #tpu.dot_dimension_numbers<[1], [0], [0], [1], [0, 0, 1, 1], [], []>} : vector<128x64xbf16>, vector<64x128xbf16>, vector<128x128xf32> -> vector<128x128xf32>
    %c0_15 = arith.constant 0 : index
    %c0_16 = arith.constant 0 : index
    %19 = vector.load %arg7[%c0_15, %c0_16] : memref<1x128xf32, #tpu.memory_space<vmem>>, vector<1x128xf32>
    %20 = vector.broadcast %19 : vector<1x128xf32> to vector<128x128xf32>
    %21 = arith.addf %18, %20 : vector<128x128xf32>
    %22 = arith.truncf %21 : vector<128x128xf32> to vector<128x128xbf16>
    %c0_17 = arith.constant 0 : index
    %c0_18 = arith.constant 0 : index
    %23 = vector.load %arg8[%c0_17, %c0_18] : memref<128x128xbf16, #tpu.memory_space<vmem>>, vector<128x128xbf16>
    tpu.vector_store %arg8[%c0_17, %c0_18], %22 {strides = array<i32>} : memref<128x128xbf16, #tpu.memory_space<vmem>>, vector<128x128xbf16>,
    return
  }
  func.func @transform_0(%arg0: i32) -> (i32, i32) {
    %c0_i32 = arith.constant 0 : i32
    %c0_i32_0 = arith.constant 0 : i32
    return %arg0, %c0_i32 : i32, i32
  }
  func.func @transform_1(%arg0: i32) -> (i32, i32) {
    %c0_i32 = arith.constant 0 : i32
    %c0_i32_0 = arith.constant 0 : i32
    %c0_i32_1 = arith.constant 0 : i32
    return %c0_i32, %c0_i32_0 : i32, i32
  }
  func.func @transform_2(%arg0: i32) -> (i32, i32) {
    %c0_i32 = arith.constant 0 : i32
    %c0_i32_0 = arith.constant 0 : i32
    %c0_i32_1 = arith.constant 0 : i32
    return %c0_i32, %c0_i32_0 : i32, i32
  }
  func.func @transform_3(%arg0: i32) -> (i32, i32) {
    %c0_i32 = arith.constant 0 : i32
    %c0_i32_0 = arith.constant 0 : i32
    %c0_i32_1 = arith.constant 0 : i32
    return %c0_i32, %c0_i32_0 : i32, i32
  }
  func.func @transform_4(%arg0: i32) -> (i32, i32) {
    %c0_i32 = arith.constant 0 : i32
    %c0_i32_0 = arith.constant 0 : i32
    %c0_i32_1 = arith.constant 0 : i32
    return %c0_i32, %c0_i32_0 : i32, i32
  }
  func.func @transform_5(%arg0: i32) -> (i32, i32) {
    %c0_i32 = arith.constant 0 : i32
    %c0_i32_0 = arith.constant 0 : i32
    %c0_i32_1 = arith.constant 0 : i32
    return %c0_i32, %c0_i32_0 : i32, i32
  }
  func.func @transform_6(%arg0: i32) -> (i32, i32) {
    %c0_i32 = arith.constant 0 : i32
    %c0_i32_0 = arith.constant 0 : i32
    %c0_i32_1 = arith.constant 0 : i32
    return %c0_i32, %c0_i32_0 : i32, i32
  }
  func.func @transform_7(%arg0: i32) -> (i32, i32) {
    %c0_i32 = arith.constant 0 : i32
    %c0_i32_0 = arith.constant 0 : i32
    return %arg0, %c0_i32 : i32, i32
  }
}

</mosaic_0001>

<llo_original>
// kernel: gesture_classifier_forward.2
$region0: #{gesture_classifier_forward.2}
  #allocation0 [shape = 'u32[]', space=smem, size = 0x4, offset = 0x4, fixed_abs, tag = 'smem constant byte address 0x4 - core index']
  #allocation1 [shape = 'u32[72,128]{1,0:T(1,128)}', space=vmem, size = 0x9000, scoped, tag = 'internal scratch']
  #allocation2 [shape = 'u32[2048]{0}', space=vmem, size = 0x2000, scoped, tag = 'scoped memory for gesture_classifier_forward.2']
  #allocation3 [shape = 'u32[2048]{0}', space=vmem, size = 0x2000, scoped, tag = 'scoped memory for gesture_classifier_forward.2']
  #allocation4 [shape = 'u32[2048]{0}', space=vmem, size = 0x2000, scoped, tag = 'scoped memory for gesture_classifier_forward.2']
  #allocation5 [shape = 'u32[2048]{0}', space=vmem, size = 0x2000, scoped, tag = 'scoped memory for gesture_classifier_forward.2']
  #allocation6 [shape = 'u32[2048]{0}', space=vmem, size = 0x2000, scoped, tag = 'scoped memory for gesture_classifier_forward.2']
  %s0 = inlined_call_operand.vmem [shape: bf16[128,128], index: 0, kind: input, shape index: {}]
  %s1 = inlined_call_operand.vmem [shape: f32[1,128], index: 1, kind: input, shape index: {}]
  %s2 = inlined_call_operand.vmem [shape: bf16[128,64], index: 2, kind: input, shape index: {}]
  %s3 = inlined_call_operand.vmem [shape: f32[1,64], index: 3, kind: input, shape index: {}]
  %s4 = inlined_call_operand.vmem [shape: bf16[64,128], index: 4, kind: input, shape index: {}]
  %s5 = inlined_call_operand.vmem [shape: f32[1,128], index: 5, kind: input, shape index: {}]
  %s6 = inlined_call_operand.vmem [shape: bf16[8,63], index: 6, kind: input, shape index: {}]
  %s7 = inlined_call_operand.<no memory space> [shape: bf16[], index: 7, kind: input, shape index: {}]
  %s8 = inlined_call_operand.vmem [shape: bf16[128,128], index: 8, kind: output, shape index: {}]
  %s9 = sld [smem:[#allocation0]]
  $region38: #{gesture_classifier_forward.2} parent=0
    _
  %s11 = ssub.s32 1, %s9
  %s12 = scalar_select 0, %s11, %s9
  %v13 = vstv %s7
  %v14 = vunpack.i.l.bf16 %v13
  %v16 = vunpack.i.h.bf16 %v13
  $region1: #{gesture_classifier_forward.2} parent=0
    #allocation7 [shape = 'u8[32768]{0}', space=vmem, size = 0x8000, dematerialized = true, scoped, tag = 'FusionAdapter Buffer %fusion.1 = bf16[128,128]{1,0:T(8,128)(2,1)} fusion(%param_6.1, %param_7), kind=kLoop, calls=%fused_computation.1.clone, metadata={op_name="jit(gesture_classifier_forward)/jit(_pad)/pad" stack_frame_id=8}']
    // Predicated region
    $region2: #{gesture_classifier_forward.2} parent=1 // pred_check
      _
    $region3: #{gesture_classifier_forward.2} parent=1 // pred_check_branch
      %19 = sbr.rel (0) target = $region5
    $region4: #{gesture_classifier_forward.2} parent=1 // pred_region
      _
    $region5: #{gesture_classifier_forward.2} parent=1 // pred_fallthru
      _
    // Predicated region
    $region6: #{gesture_classifier_forward.2} parent=1 // pred_check
      _
    $region7: #{gesture_classifier_forward.2} parent=1 // pred_check_branch
      %21 = sbr.rel (0) target = $region9
    $region8: #{gesture_classifier_forward.2} parent=1 // pred_region
      _
    $region9: #{gesture_classifier_forward.2} parent=1 // pred_fallthru
      _
    // Predicated region
    $region10: #{gesture_classifier_forward.2} parent=1 // pred_check
      _
    $region11: #{gesture_classifier_forward.2} parent=1 // pred_check_branch
      %23 = sbr.rel (0) target = $region13
    $region12: #{gesture_classifier_forward.2} parent=1 // pred_region
      _
    $region13: #{gesture_classifier_forward.2} parent=1 // pred_fallthru
      _
    // Predicated region
    $region14: #{gesture_classifier_forward.2} parent=1 // pred_check
      _
    $region15: #{gesture_classifier_forward.2} parent=1 // pred_check_branch
      %25 = sbr.rel (0) target = $region17
    $region16: #{gesture_classifier_forward.2} parent=1 // pred_region
      _
    $region17: #{gesture_classifier_forward.2} parent=1 // pred_fallthru
      _
    // Predicated region
    $region18: #{gesture_classifier_forward.2} parent=1 // pred_check
      _
    $region19: #{gesture_classifier_forward.2} parent=1 // pred_check_branch
      %27 = sbr.rel (0) target = $region21
    $region20: #{gesture_classifier_forward.2} parent=1 // pred_region
      _
    $region21: #{gesture_classifier_forward.2} parent=1 // pred_fallthru
      _
    // Predicated region
    $region22: #{gesture_classifier_forward.2} parent=1 // pred_check
      _
    $region23: #{gesture_classifier_forward.2} parent=1 // pred_check_branch
      %29 = sbr.rel (0) target = $region25
    $region24: #{gesture_classifier_forward.2} parent=1 // pred_region
      _
    $region25: #{gesture_classifier_forward.2} parent=1 // pred_fallthru
      _
    // Predicated region
    $region26: #{gesture_classifier_forward.2} parent=1 // pred_check
      _
    $region27: #{gesture_classifier_forward.2} parent=1 // pred_check_branch
      %31 = sbr.rel (0) target = $region29
    $region28: #{gesture_classifier_forward.2} parent=1 // pred_region
      _
    $region29: #{gesture_classifier_forward.2} parent=1 // pred_fallthru
      _
    %s33 = sor.u32 255, 127
    %s34 = sand.u32 %s33, 85
    %s35 = sshrl.u32 %s34, 1
    %s36 = sor.u32 %s34, %s35
    %s37 = sand.u32 51, %s36
    %s38 = sshrl.u32 %s37, 2
    %s39 = sor.u32 %s37, %s38
    %s40 = sand.u32 15, %s39
    %v41 = vld [vmem:[%s6] sm:%s40]
    %v42 = vunpack.c.l.bf16 %v41
    %v43 = vunpack.c.h.bf16 %v41
    %v44 = vlaneseq
    %v45 = vand.u32 %v44, 127
    %vm47 = vcmp.lt.s32.totalorder %v45, 63
    %v48 = vsel %vm47, %v42, %v14
    %v49 = vpack.c.bf16 0.0, %v48
    %s51 = ssub.s32 16, 1
    %52 = vst [vmem:[#allocation7] sm:%s51] %v49
    %s53 = scalar_lea.vmem [#allocation7], 4
    %v54 = vpack.c.bf16 0.0, %v14
    %s56 = ssub.s32 16, 1
    %57 = vst [vmem:[%s53] sm:%s56] %v54
    %s58 = scalar_lea.vmem [#allocation7], 8
    %v59 = vpack.c.bf16 0.0, %v14
    %s61 = ssub.s32 16, 1
    %62 = vst [vmem:[%s58] sm:%s61] %v59
    %s63 = scalar_lea.vmem [#allocation7], 12
    %v64 = vpack.c.bf16 0.0, %v14
    %s66 = ssub.s32 16, 1
    %67 = vst [vmem:[%s63] sm:%s66] %v64
    %s68 = scalar_lea.vmem [#allocation7], 16
    %v69 = vpack.c.bf16 0.0, %v14
    %s71 = ssub.s32 16, 1
    %72 = vst [vmem:[%s68] sm:%s71] %v69
    %s73 = scalar_lea.vmem [#allocation7], 20
    %v74 = vpack.c.bf16 0.0, %v14
    %s76 = ssub.s32 16, 1
    %77 = vst [vmem:[%s73] sm:%s76] %v74
    %s78 = scalar_lea.vmem [#allocation7], 24
    %v79 = vpack.c.bf16 0.0, %v14
    %s81 = ssub.s32 16, 1
    %82 = vst [vmem:[%s78] sm:%s81] %v79
    %s83 = scalar_lea.vmem [#allocation7], 28
    %v84 = vpack.c.bf16 0.0, %v14
    %s86 = ssub.s32 16, 1
    %87 = vst [vmem:[%s83] sm:%s86] %v84
    %s88 = scalar_lea.vmem [#allocation7], 32
    %v89 = vpack.c.bf16 0.0, %v14
    %s91 = ssub.s32 16, 1
    %92 = vst [vmem:[%s88] sm:%s91] %v89
    %s93 = scalar_lea.vmem [#allocation7], 36
    %v94 = vpack.c.bf16 0.0, %v14
    %s96 = ssub.s32 16, 1
    %97 = vst [vmem:[%s93] sm:%s96] %v94
    %s98 = scalar_lea.vmem [#allocation7], 40
    %v99 = vpack.c.bf16 0.0, %v14
    %s101 = ssub.s32 16, 1
    %102 = vst [vmem:[%s98] sm:%s101] %v99
    %s103 = scalar_lea.vmem [#allocation7], 44
    %v104 = vpack.c.bf16 0.0, %v14
    %s106 = ssub.s32 16, 1
    %107 = vst [vmem:[%s103] sm:%s106] %v104
    %s108 = scalar_lea.vmem [#allocation7], 48
    %v109 = vpack.c.bf16 0.0, %v14
    %s111 = ssub.s32 16, 1
    %112 = vst [vmem:[%s108] sm:%s111] %v109
    %s113 = scalar_lea.vmem [#allocation7], 52
    %v114 = vpack.c.bf16 0.0, %v14
    %s116 = ssub.s32 16, 1
    %117 = vst [vmem:[%s113] sm:%s116] %v114
    %s118 = scalar_lea.vmem [#allocation7], 56
    %v119 = vpack.c.bf16 0.0, %v14
    %s121 = ssub.s32 16, 1
    %122 = vst [vmem:[%s118] sm:%s121] %v119
    %s123 = scalar_lea.vmem [#allocation7], 60
    %v124 = vpack.c.bf16 0.0, %v14
    %s126 = ssub.s32 16, 1
    %127 = vst [vmem:[%s123] sm:%s126] %v124
    %v129 = vld [vmem:[#allocation7] sm:$0xf]
    %v130 = vld [vmem:[#allocation7 + $0x4] sm:$0xf]
    %v131 = vld [vmem:[#allocation7 + $0x8] sm:$0xf]
    %v132 = vld [vmem:[#allocation7 + $0xc] sm:$0xf]
    %v133 = vld [vmem:[#allocation7 + $0x10] sm:$0xf]
    %v134 = vld [vmem:[#allocation7 + $0x14] sm:$0xf]
    %v135 = vld [vmem:[#allocation7 + $0x18] sm:$0xf]
    %v136 = vld [vmem:[#allocation7 + $0x1c] sm:$0xf]
    %v137 = vld [vmem:[#allocation7 + $0x20] sm:$0xf]
    %v138 = vld [vmem:[#allocation7 + $0x24] sm:$0xf]
    %v139 = vld [vmem:[#allocation7 + $0x28] sm:$0xf]
    %v140 = vld [vmem:[#allocation7 + $0x2c] sm:$0xf]
    %v141 = vld [vmem:[#allocation7 + $0x30] sm:$0xf]
    %v142 = vld [vmem:[#allocation7 + $0x34] sm:$0xf]
    %v143 = vld [vmem:[#allocation7 + $0x38] sm:$0xf]
    %v144 = vld [vmem:[#allocation7 + $0x3c] sm:$0xf]
    %v145 = vld [vmem:[%s0] sm:$0xf]
    %v146 = vld [vmem:[%s0 + $0x4] sm:$0xf]
    %v147 = vld [vmem:[%s0 + $0x8] sm:$0xf]
    %v148 = vld [vmem:[%s0 + $0xc] sm:$0xf]
    %v149 = vld [vmem:[%s0 + $0x10] sm:$0xf]
    %v150 = vld [vmem:[%s0 + $0x14] sm:$0xf]
    %v151 = vld [vmem:[%s0 + $0x18] sm:$0xf]
    %v152 = vld [vmem:[%s0 + $0x1c] sm:$0xf]
    %v153 = vld [vmem:[%s0 + $0x20] sm:$0xf]
    %v154 = vld [vmem:[%s0 + $0x24] sm:$0xf]
    %v155 = vld [vmem:[%s0 + $0x28] sm:$0xf]
    %v156 = vld [vmem:[%s0 + $0x2c] sm:$0xf]
    %v157 = vld [vmem:[%s0 + $0x30] sm:$0xf]
    %v158 = vld [vmem:[%s0 + $0x34] sm:$0xf]
    %v159 = vld [vmem:[%s0 + $0x38] sm:$0xf]
    %v160 = vld [vmem:[%s0 + $0x3c] sm:$0xf]
    %v161 = vld [vmem:[%s1] sm:$0x1]
    %v163 = vperm.slane %v161, 0
    %v181 = vunpack.c.l.b16 %v129
    %v182 = vunpack.c.l.b16 %v130
    %v183 = vunpack.c.l.b16 %v131
    %v184 = vunpack.c.l.b16 %v132
    %v185 = vunpack.c.l.b16 %v133
    %v186 = vunpack.c.l.b16 %v134
    %v187 = vunpack.c.l.b16 %v135
    %v188 = vunpack.c.l.b16 %v136
    %v189 = vunpack.c.l.b16 %v137
    %v190 = vunpack.c.l.b16 %v138
    %v191 = vunpack.c.l.b16 %v139
    %v192 = vunpack.c.l.b16 %v140
    %v193 = vunpack.c.l.b16 %v141
    %v194 = vunpack.c.l.b16 %v142
    %v195 = vunpack.c.l.b16 %v143
    %v196 = vunpack.c.l.b16 %v144
    %v197 = vpack.c.b16 %v182, %v181
    %v198 = vpack.c.b16 %v184, %v183
    %v199 = vpack.c.b16 %v186, %v185
    %v200 = vpack.c.b16 %v188, %v187
    %v201 = vpack.c.b16 %v190, %v189
    %v202 = vpack.c.b16 %v192, %v191
    %v203 = vpack.c.b16 %v194, %v193
    %v204 = vpack.c.b16 %v196, %v195
    %v229 = vunpack.c.l.b16 %v145
    %v230 = vunpack.c.l.b16 %v146
    %v231 = vunpack.c.l.b16 %v147
    %v232 = vunpack.c.l.b16 %v148
    %v233 = vunpack.c.l.b16 %v149
    %v234 = vunpack.c.l.b16 %v150
    %v235 = vunpack.c.l.b16 %v151
    %v236 = vunpack.c.l.b16 %v152
    %v237 = vunpack.c.l.b16 %v153
    %v238 = vunpack.c.l.b16 %v154
    %v239 = vunpack.c.l.b16 %v155
    %v240 = vunpack.c.l.b16 %v156
    %v241 = vunpack.c.l.b16 %v157
    %v242 = vunpack.c.l.b16 %v158
    %v243 = vunpack.c.l.b16 %v159
    %v244 = vunpack.c.l.b16 %v160
    %v245 = vpack.c.b16 %v230, %v229
    %v246 = vpack.c.b16 %v232, %v231
    %v247 = vpack.c.b16 %v234, %v233
    %v248 = vpack.c.b16 %v236, %v235
    %v249 = vpack.c.b16 %v238, %v237
    %v250 = vpack.c.b16 %v240, %v239
    %v251 = vpack.c.b16 %v242, %v241
    %v252 = vpack.c.b16 %v244, %v243
    %261 = vmatpush.bf16.msra.mxu0 %v252
    %262 = vmatpush.bf16.msra.mxu0 %v251
    %263 = vmatpush.bf16.msra.mxu0 %v250
    %264 = vmatpush.bf16.msra.mxu0 %v249
    %265 = vmatpush.bf16.msra.mxu0 %v248
    %266 = vmatpush.bf16.msra.mxu0 %v247
    %267 = vmatpush.bf16.msra.mxu0 %v246
    %268 = vmatpush.bf16.msra.mxu0 %v245
    %269 = vmatmul.bf16.gmra.mxu0 %v197
    %v270 = vpop.f32.mrf.mxu0
    %v271 = vadd.f32 %v163, %v270
    %v272 = vpop.f32.mrf.mxu0
    %v273 = vadd.f32 %v163, %v272
    %274 = vmatmul.bf16.gmra.mxu0 %v198
    %v275 = vpop.f32.mrf.mxu0
    %v276 = vadd.f32 %v163, %v275
    %v277 = vpop.f32.mrf.mxu0
    %v278 = vadd.f32 %v163, %v277
    %279 = vmatmul.bf16.gmra.mxu0 %v199
    %v280 = vpop.f32.mrf.mxu0
    %v281 = vadd.f32 %v163, %v280
    %v282 = vpop.f32.mrf.mxu0
    %v283 = vadd.f32 %v163, %v282
    %284 = vmatmul.bf16.gmra.mxu0 %v200
    %v285 = vpop.f32.mrf.mxu0
    %v286 = vadd.f32 %v163, %v285
    %v287 = vpop.f32.mrf.mxu0
    %v288 = vadd.f32 %v163, %v287
    %289 = vmatmul.bf16.gmra.mxu0 %v201
    %v290 = vpop.f32.mrf.mxu0
    %v291 = vadd.f32 %v163, %v290
    %v292 = vpop.f32.mrf.mxu0
    %v293 = vadd.f32 %v163, %v292
    %294 = vmatmul.bf16.gmra.mxu0 %v202
    %v295 = vpop.f32.mrf.mxu0
    %v296 = vadd.f32 %v163, %v295
    %v297 = vpop.f32.mrf.mxu0
    %v298 = vadd.f32 %v163, %v297
    %299 = vmatmul.bf16.gmra.mxu0 %v203
    %v300 = vpop.f32.mrf.mxu0
    %v301 = vadd.f32 %v163, %v300
    %v302 = vpop.f32.mrf.mxu0
    %v303 = vadd.f32 %v163, %v302
    %304 = vmatmul.bf16.gmra.mxu0 %v204
    %v305 = vpop.f32.mrf.mxu0
    %v306 = vadd.f32 %v163, %v305
    %v307 = vpop.f32.mrf.mxu0
    %v308 = vadd.f32 %v163, %v307
    %309 = vdwg.mxu0
    %v310 = vmax.f32 %v271, 0.0
    %v311 = vmax.f32 %v273, 0.0
    %v312 = vmax.f32 %v276, 0.0
    %v313 = vmax.f32 %v278, 0.0
    %v314 = vmax.f32 %v281, 0.0
    %v315 = vmax.f32 %v283, 0.0
    %v316 = vmax.f32 %v286, 0.0
    %v317 = vmax.f32 %v288, 0.0
    %v318 = vmax.f32 %v291, 0.0
    %v319 = vmax.f32 %v293, 0.0
    %v320 = vmax.f32 %v296, 0.0
    %v321 = vmax.f32 %v298, 0.0
    %v322 = vmax.f32 %v301, 0.0
    %v323 = vmax.f32 %v303, 0.0
    %v324 = vmax.f32 %v306, 0.0
    %v325 = vmax.f32 %v308, 0.0
    %v326 = vpack.c.bf16 %v311, %v310
    %v327 = vpack.c.bf16 %v313, %v312
    %v328 = vpack.c.bf16 %v315, %v314
    %v329 = vpack.c.bf16 %v317, %v316
    %v330 = vpack.c.bf16 %v319, %v318
    %v331 = vpack.c.bf16 %v321, %v320
    %v332 = vpack.c.bf16 %v323, %v322
    %v333 = vpack.c.bf16 %v325, %v324
    %v334 = vld [vmem:[%s2] sm:$0xf]
    %v335 = vld [vmem:[%s2 + $0x4] sm:$0xf]
    %v336 = vld [vmem:[%s2 + $0x8] sm:$0xf]
    %v337 = vld [vmem:[%s2 + $0xc] sm:$0xf]
    %v338 = vld [vmem:[%s2 + $0x10] sm:$0xf]
    %v339 = vld [vmem:[%s2 + $0x14] sm:$0xf]
    %v340 = vld [vmem:[%s2 + $0x18] sm:$0xf]
    %v341 = vld [vmem:[%s2 + $0x1c] sm:$0xf]
    %v342 = vld [vmem:[%s2 + $0x20] sm:$0xf]
    %v343 = vld [vmem:[%s2 + $0x24] sm:$0xf]
    %v344 = vld [vmem:[%s2 + $0x28] sm:$0xf]
    %v345 = vld [vmem:[%s2 + $0x2c] sm:$0xf]
    %v346 = vld [vmem:[%s2 + $0x30] sm:$0xf]
    %v347 = vld [vmem:[%s2 + $0x34] sm:$0xf]
    %v348 = vld [vmem:[%s2 + $0x38] sm:$0xf]
    %v349 = vld [vmem:[%s2 + $0x3c] sm:$0xf]
    %v350 = vld [vmem:[%s3] sm:$0x1]
    %v352 = vperm.slane %v350, 0
    %v370 = vunpack.c.l.b16 %v334
    %v371 = vunpack.c.l.b16 %v335
    %v372 = vunpack.c.l.b16 %v336
    %v373 = vunpack.c.l.b16 %v337
    %v374 = vunpack.c.l.b16 %v338
    %v375 = vunpack.c.l.b16 %v339
    %v376 = vunpack.c.l.b16 %v340
    %v377 = vunpack.c.l.b16 %v341
    %v378 = vunpack.c.l.b16 %v342
    %v379 = vunpack.c.l.b16 %v343
    %v380 = vunpack.c.l.b16 %v344
    %v381 = vunpack.c.l.b16 %v345
    %v382 = vunpack.c.l.b16 %v346
    %v383 = vunpack.c.l.b16 %v347
    %v384 = vunpack.c.l.b16 %v348
    %v385 = vunpack.c.l.b16 %v349
    %v386 = vpack.c.b16 %v371, %v370
    %v387 = vpack.c.b16 %v373, %v372
    %v388 = vpack.c.b16 %v375, %v374
    %v389 = vpack.c.b16 %v377, %v376
    %v390 = vpack.c.b16 %v379, %v378
    %v391 = vpack.c.b16 %v381, %v380
    %v392 = vpack.c.b16 %v383, %v382
    %v393 = vpack.c.b16 %v385, %v384
    %402 = vmatpush.bf16.msra.mxu0 %v393
    %403 = vmatpush.bf16.msra.mxu0 %v392
    %404 = vmatpush.bf16.msra.mxu0 %v391
    %405 = vmatpush.bf16.msra.mxu0 %v390
    %406 = vmatpush.bf16.msra.mxu0 %v389
    %407 = vmatpush.bf16.msra.mxu0 %v388
    %408 = vmatpush.bf16.msra.mxu0 %v387
    %409 = vmatpush.bf16.msra.mxu0 %v386
    %410 = vmatmul.bf16.gmra.mxu0 %v326
    %v411 = vpop.f32.mrf.mxu0
    %v412 = vadd.f32 %v352, %v411
    %v413 = vpop.f32.mrf.mxu0
    %v414 = vadd.f32 %v352, %v413
    %415 = vmatmul.bf16.gmra.mxu0 %v327
    %v416 = vpop.f32.mrf.mxu0
    %v417 = vadd.f32 %v352, %v416
    %v418 = vpop.f32.mrf.mxu0
    %v419 = vadd.f32 %v352, %v418
    %420 = vmatmul.bf16.gmra.mxu0 %v328
    %v421 = vpop.f32.mrf.mxu0
    %v422 = vadd.f32 %v352, %v421
    %v423 = vpop.f32.mrf.mxu0
    %v424 = vadd.f32 %v352, %v423
    %425 = vmatmul.bf16.gmra.mxu0 %v329
    %v426 = vpop.f32.mrf.mxu0
    %v427 = vadd.f32 %v352, %v426
    %v428 = vpop.f32.mrf.mxu0
    %v429 = vadd.f32 %v352, %v428
    %430 = vmatmul.bf16.gmra.mxu0 %v330
    %v431 = vpop.f32.mrf.mxu0
    %v432 = vadd.f32 %v352, %v431
    %v433 = vpop.f32.mrf.mxu0
    %v434 = vadd.f32 %v352, %v433
    %435 = vmatmul.bf16.gmra.mxu0 %v331
    %v436 = vpop.f32.mrf.mxu0
    %v437 = vadd.f32 %v352, %v436
    %v438 = vpop.f32.mrf.mxu0
    %v439 = vadd.f32 %v352, %v438
    %440 = vmatmul.bf16.gmra.mxu0 %v332
    %v441 = vpop.f32.mrf.mxu0
    %v442 = vadd.f32 %v352, %v441
    %v443 = vpop.f32.mrf.mxu0
    %v444 = vadd.f32 %v352, %v443
    %445 = vmatmul.bf16.gmra.mxu0 %v333
    %v446 = vpop.f32.mrf.mxu0
    %v447 = vadd.f32 %v352, %v446
    %v448 = vpop.f32.mrf.mxu0
    %v449 = vadd.f32 %v352, %v448
    %450 = vdwg.mxu0
    %v451 = vmax.f32 %v412, 0.0
    %v452 = vmax.f32 %v414, 0.0
    %v453 = vmax.f32 %v417, 0.0
    %v454 = vmax.f32 %v419, 0.0
    %v455 = vmax.f32 %v422, 0.0
    %v456 = vmax.f32 %v424, 0.0
    %v457 = vmax.f32 %v427, 0.0
    %v458 = vmax.f32 %v429, 0.0
    %v459 = vmax.f32 %v432, 0.0
    %v460 = vmax.f32 %v434, 0.0
    %v461 = vmax.f32 %v437, 0.0
    %v462 = vmax.f32 %v439, 0.0
    %v463 = vmax.f32 %v442, 0.0
    %v464 = vmax.f32 %v444, 0.0
    %v465 = vmax.f32 %v447, 0.0
    %v466 = vmax.f32 %v449, 0.0
    %v467 = vpack.c.bf16 %v452, %v451
    %v468 = vpack.c.bf16 %v454, %v453
    %v469 = vpack.c.bf16 %v456, %v455
    %v470 = vpack.c.bf16 %v458, %v457
    %v471 = vpack.c.bf16 %v460, %v459
    %v472 = vpack.c.bf16 %v462, %v461
    %v473 = vpack.c.bf16 %v464, %v463
    %v474 = vpack.c.bf16 %v466, %v465
    %v475 = vld [vmem:[%s4] sm:$0xf]
    %v476 = vld [vmem:[%s4 + $0x4] sm:$0xf]
    %v477 = vld [vmem:[%s4 + $0x8] sm:$0xf]
    %v478 = vld [vmem:[%s4 + $0xc] sm:$0xf]
    %v479 = vld [vmem:[%s4 + $0x10] sm:$0xf]
    %v480 = vld [vmem:[%s4 + $0x14] sm:$0xf]
    %v481 = vld [vmem:[%s4 + $0x18] sm:$0xf]
    %v482 = vld [vmem:[%s4 + $0x1c] sm:$0xf]
    %v483 = vld [vmem:[%s5] sm:$0x1]
    %v485 = vperm.slane %v483, 0
    %v495 = vunpack.c.l.b16 %v475
    %v496 = vunpack.c.l.b16 %v476
    %v497 = vunpack.c.l.b16 %v477
    %v498 = vunpack.c.l.b16 %v478
    %v499 = vunpack.c.l.b16 %v479
    %v500 = vunpack.c.l.b16 %v480
    %v501 = vunpack.c.l.b16 %v481
    %v502 = vunpack.c.l.b16 %v482
    %v503 = vpack.c.b16 %v496, %v495
    %v504 = vpack.c.b16 %v498, %v497
    %v505 = vpack.c.b16 %v500, %v499
    %v506 = vpack.c.b16 %v502, %v501
    %vm511 = vcmask 523264
    %v513 = vsel %vm511, %v467, 0
    %v516 = vsel %vm511, %v468, 0
    %v519 = vsel %vm511, %v469, 0
    %v522 = vsel %vm511, %v470, 0
    %v525 = vsel %vm511, %v471, 0
    %v528 = vsel %vm511, %v472, 0
    %v531 = vsel %vm511, %v473, 0
    %v534 = vsel %vm511, %v474, 0
    %536 = vmatpush.bf16.msra.mxu0 0
    %537 = vmatpush.bf16.msra.mxu0 0
    %538 = vmatpush.bf16.msra.mxu0 0
    %539 = vmatpush.bf16.msra.mxu0 0
    %540 = vmatpush.bf16.msra.mxu0 %v506
    %541 = vmatpush.bf16.msra.mxu0 %v505
    %542 = vmatpush.bf16.msra.mxu0 %v504
    %543 = vmatpush.bf16.msra.mxu0 %v503
    %544 = vmatmul.bf16.gmra.mxu0 %v513
    %v545 = vpop.f32.mrf.mxu0
    %v546 = vadd.f32 %v485, %v545
    %v547 = vpop.f32.mrf.mxu0
    %v548 = vadd.f32 %v485, %v547
    %549 = vmatmul.bf16.gmra.mxu0 %v516
    %v550 = vpop.f32.mrf.mxu0
    %v551 = vadd.f32 %v485, %v550
    %v552 = vpop.f32.mrf.mxu0
    %v553 = vadd.f32 %v485, %v552
    %554 = vmatmul.bf16.gmra.mxu0 %v519
    %v555 = vpop.f32.mrf.mxu0
    %v556 = vadd.f32 %v485, %v555
    %v557 = vpop.f32.mrf.mxu0
    %v558 = vadd.f32 %v485, %v557
    %559 = vmatmul.bf16.gmra.mxu0 %v522
    %v560 = vpop.f32.mrf.mxu0
    %v561 = vadd.f32 %v485, %v560
    %v562 = vpop.f32.mrf.mxu0
    %v563 = vadd.f32 %v485, %v562
    %564 = vmatmul.bf16.gmra.mxu0 %v525
    %v565 = vpop.f32.mrf.mxu0
    %v566 = vadd.f32 %v485, %v565
    %v567 = vpop.f32.mrf.mxu0
    %v568 = vadd.f32 %v485, %v567
    %569 = vmatmul.bf16.gmra.mxu0 %v528
    %v570 = vpop.f32.mrf.mxu0
    %v571 = vadd.f32 %v485, %v570
    %v572 = vpop.f32.mrf.mxu0
    %v573 = vadd.f32 %v485, %v572
    %574 = vmatmul.bf16.gmra.mxu0 %v531
    %v575 = vpop.f32.mrf.mxu0
    %v576 = vadd.f32 %v485, %v575
    %v577 = vpop.f32.mrf.mxu0
    %v578 = vadd.f32 %v485, %v577
    %579 = vmatmul.bf16.gmra.mxu0 %v534
    %v580 = vpop.f32.mrf.mxu0
    %v581 = vadd.f32 %v485, %v580
    %v582 = vpop.f32.mrf.mxu0
    %v583 = vadd.f32 %v485, %v582
    %584 = vdwg.mxu0
    %v585 = vpack.c.bf16 %v546, %v546
    %v586 = vpack.c.bf16 %v548, %v548
    %v587 = vpack.c.bf16 %v551, %v551
    %v588 = vpack.c.bf16 %v553, %v553
    %v589 = vpack.c.bf16 %v556, %v556
    %v590 = vpack.c.bf16 %v558, %v558
    %v591 = vpack.c.bf16 %v561, %v561
    %v592 = vpack.c.bf16 %v563, %v563
    %v593 = vpack.c.bf16 %v566, %v566
    %v594 = vpack.c.bf16 %v568, %v568
    %v595 = vpack.c.bf16 %v571, %v571
    %v596 = vpack.c.bf16 %v573, %v573
    %v597 = vpack.c.bf16 %v576, %v576
    %v598 = vpack.c.bf16 %v578, %v578
    %v599 = vpack.c.bf16 %v581, %v581
    %v600 = vpack.c.bf16 %v583, %v583
    %601 = vst [vmem:[%s8] sm:$0xf] %v585
    %602 = vst [vmem:[%s8 + $0x4] sm:$0xf] %v586
    %603 = vst [vmem:[%s8 + $0x8] sm:$0xf] %v587
    %604 = vst [vmem:[%s8 + $0xc] sm:$0xf] %v588
    %605 = vst [vmem:[%s8 + $0x10] sm:$0xf] %v589
    %606 = vst [vmem:[%s8 + $0x14] sm:$0xf] %v590
    %607 = vst [vmem:[%s8 + $0x18] sm:$0xf] %v591
    %608 = vst [vmem:[%s8 + $0x1c] sm:$0xf] %v592
    %609 = vst [vmem:[%s8 + $0x20] sm:$0xf] %v593
    %610 = vst [vmem:[%s8 + $0x24] sm:$0xf] %v594
    %611 = vst [vmem:[%s8 + $0x28] sm:$0xf] %v595
    %612 = vst [vmem:[%s8 + $0x2c] sm:$0xf] %v596
    %613 = vst [vmem:[%s8 + $0x30] sm:$0xf] %v597
    %614 = vst [vmem:[%s8 + $0x34] sm:$0xf] %v598
    %615 = vst [vmem:[%s8 + $0x38] sm:$0xf] %v599
    %616 = vst [vmem:[%s8 + $0x3c] sm:$0xf] %v600
    // Predicated region
    $region30: #{gesture_classifier_forward.2} parent=1 // pred_check
      _
    $region31: #{gesture_classifier_forward.2} parent=1 // pred_check_branch
      %618 = sbr.rel (0) target = $region33
    $region32: #{gesture_classifier_forward.2} parent=1 // pred_region
      _
    $region33: #{gesture_classifier_forward.2} parent=1 // pred_fallthru
      _
    // Predicated region
    $region34: #{gesture_classifier_forward.2} parent=1 // pred_check
      _
    $region35: #{gesture_classifier_forward.2} parent=1 // pred_check_branch
      %620 = sbr.rel (0) target = $region37
    $region36: #{gesture_classifier_forward.2} parent=1 // pred_region
      _
    $region37: #{gesture_classifier_forward.2} parent=1 // pred_fallthru
      _

</llo_original>
